<compile_context>
chip_gen: v6e
topology: v6e:2x2x1
jax: 0.10.0
libtpu: 0.0.40
codegen_flags: <defaults>
</compile_context>

<pallas_src>
import functools

import jax
import jax.numpy as jnp
from jax import lax
from jax.experimental import pallas as pl
from jax.experimental.pallas import tpu as pltpu

LANES = 128
MAX_TILE_ROWS = 4096           # (4096,128) f32 block = 2 MiB; ~6 MiB total w/ dbl-buf
APPROX_RECIPROCAL = False      # EUP vrcp; only worth it on VALU-bound configs (v7x)


def _round_up(v, m):
    return (v + m - 1) // m * m


def _sublane_multiple(*dtypes):
    """Minimum second-to-last block dim: 8 for 32-bit, 16 for bf16, 32 for int8."""
    itemsize = min(jnp.dtype(d).itemsize for d in dtypes)
    return 8 * max(1, 4 // itemsize)


def _num_core_splits():
    """2-way grid split only on chips with >1 TensorCore (v7x); else 1."""
    try:
        info = pltpu.get_tpu_info()
    except Exception:
        return 1
    for name in ("num_cores", "num_tensorcores", "num_cores_per_chip", "core_count"):
        v = getattr(info, name, None)
        if isinstance(v, int) and v > 1:
            return 2
    return 1


def _bce_iou_partial_kernel(x_ref, y_ref, out_ref,
                            inter_acc, union_acc, bce_acc,
                            *, valid_rows, num_tiles):
    c = pl.program_id(0)              # core-split index
    i = pl.program_id(1)              # tile index within split (reduction axis)
    tpc = pl.num_programs(1)
    tile_rows = x_ref.shape[0]

    @pl.when(i == 0)
    def _():
        inter_acc[...] = jnp.zeros_like(inter_acc)
        union_acc[...] = jnp.zeros_like(union_acc)
        bce_acc[...] = jnp.zeros_like(bce_acc)

    tile_idx = c * tpc + i
    row_start = tile_idx * tile_rows

    def accumulate(masked):
        x = x_ref[...].astype(jnp.float32)
        y = y_ref[...].astype(jnp.float32)
        if masked:
            # Only the single boundary tile pays for the iota/mask work.
            row_ids = lax.broadcasted_iota(jnp.int32, x.shape, 0)
            mask = (row_start + row_ids) < valid_rows
            x = jnp.where(mask, x, 0.0)      # sanitize undefined tail data
            y = jnp.where(mask, y, 0.0)

        # One shared exp(-|x|) feeds both sigmoid and the BCE log1p term.
        e = jnp.exp(-jnp.abs(x))
        r = pl.reciprocal(1.0 + e, approx=APPROX_RECIPROCAL)
        p = jnp.where(x >= 0.0, r, e * r)                      # sigmoid(x)
        bce = jnp.maximum(x, 0.0) - x * y + jnp.log1p(e)

        if masked:
            p = jnp.where(mask, p, 0.0)      # sigmoid(0)=0.5 on dead rows
            bce = jnp.where(mask, bce, 0.0)  # log(2) on dead rows

        # Partial-reduce each quantity down to one (8,128) vreg (layout-preserving
        # reshape -> pure VPU adds); accumulators stay vreg-sized.
        nsub = tile_rows // 8
        inter_acc[...] += (p * y).reshape(nsub, 8, LANES).sum(axis=0)
        union_acc[...] += (p + y).reshape(nsub, 8, LANES).sum(axis=0)
        bce_acc[...] += bce.reshape(nsub, 8, LANES).sum(axis=0)

    is_valid = tile_idx < num_tiles                 # clamped duplicates skip compute
    is_full = (row_start + tile_rows) <= valid_rows

    @pl.when(is_valid & is_full)
    def _():
        accumulate(False)                           # fast path: no mask at all

    @pl.when(is_valid & jnp.logical_not(is_full))
    def _():
        accumulate(True)                            # boundary tile only

    @pl.when(i == tpc - 1)
    def _():
        out_ref[0, 0] = jnp.sum(inter_acc[...])     # sum(sigmoid(x) * y)
        out_ref[0, 1] = jnp.sum(union_acc[...])     # sum(sigmoid(x)) + sum(y)
        out_ref[0, 2] = jnp.sum(bce_acc[...])       # bce sum


def _tail_sums(x, y):
    """Plain-JAX partial sums for the (<128 element) lane-unaligned remainder."""
    x = x.astype(jnp.float32)
    y = y.astype(jnp.float32)
    p = jax.nn.sigmoid(x)
    inter = jnp.sum(p * y)
    union = jnp.sum(p) + jnp.sum(y)
    bce = jnp.sum(jnp.maximum(x, 0.0) - x * y + jnp.log1p(jnp.exp(-jnp.abs(x))))
    return inter, union, bce


def bce_iou_loss(outputs, targets, eps=1e-7):
    """outputs, targets: NCHW arrays (logits / {0,1} targets)."""
    assert outputs.shape == targets.shape
    n_elems = outputs.size
    assert n_elems > 0

    x = outputs.reshape(-1)                 # free bitcast; logits keep their dtype
    y = targets.reshape(-1)
    # Narrow the targets stream: {0,1} masks are lossless in bf16; halves the y
    # bytes the kernel reads (fuses with the producer when jitted end-to-end).
    if not (jnp.issubdtype(y.dtype, jnp.floating) and jnp.dtype(y.dtype).itemsize <= 2):
        y = y.astype(jnp.bfloat16)

    # No full-array padding: lane-aligned prefix goes through the kernel, the
    # <=127-element remainder is folded in with plain jnp.
    rem = n_elems % LANES
    n_main = n_elems - rem
    tail = (jnp.float32(0.0), jnp.float32(0.0), jnp.float32(0.0))
    if rem:
        tail = _tail_sums(outputs.reshape(-1)[n_main:], targets.reshape(-1)[n_main:])
        x = x[:n_main]
        y = y[:n_main]

    rows = n_main // LANES
    x2 = x.reshape(rows, LANES)
    y2 = y.reshape(rows, LANES)

    splits = _num_core_splits()
    sub = _sublane_multiple(x2.dtype, y2.dtype)
    tile_rows = min(MAX_TILE_ROWS, _round_up(pl.cdiv(rows, splits), sub))
    num_tiles = pl.cdiv(rows, tile_rows)
    tpc = pl.cdiv(num_tiles, splits)        # tiles per core-split
    grid = (splits, tpc)

    def in_map(c, i):
        # Clamp so over-range grid points re-read a valid tile; their compute is
        # skipped in-kernel, keeping every DMA in bounds.
        return (jnp.minimum(c * tpc + i, num_tiles - 1), 0)

    kernel = functools.partial(_bce_iou_partial_kernel,
                               valid_rows=rows, num_tiles=num_tiles)

    split_sem = (getattr(pltpu, "CORE_PARALLEL", "parallel")
                 if splits > 1 else "arbitrary")

    partials = pl.pallas_call(
        kernel,
        out_shape=jax.ShapeDtypeStruct((splits, 3), jnp.float32),
        grid_spec=pltpu.PrefetchScalarGridSpec(
            num_scalar_prefetch=0,
            grid=grid,
            in_specs=[
                pl.BlockSpec((tile_rows, LANES), in_map),
                pl.BlockSpec((tile_rows, LANES), in_map),
            ],
            out_specs=pl.BlockSpec((1, 3), lambda c, i: (c, 0),
                                   memory_space=pltpu.SMEM),
            scratch_shapes=[pltpu.VMEM((8, LANES), jnp.float32)] * 3,
        ),
        compiler_params=pltpu.CompilerParams(
            dimension_semantics=(split_sem, "arbitrary"),
            vmem_limit_bytes=32 * 1024 * 1024,
        ),
    )(x2, y2)

    # Combine the per-split partial sums (+ tiny jnp tail) and finish the loss.
    inter = partials[:, 0].sum() + tail[0]
    union = partials[:, 1].sum() + tail[1]
    bce_sum = partials[:, 2].sum() + tail[2]
    iou = inter / (union - inter + eps)
    return (1.0 - iou) + bce_sum / n_elems


def _reference(outputs, targets, eps=1e-7):
    x = outputs.astype(jnp.float32)
    y = targets.astype(jnp.float32)
    p = jax.nn.sigmoid(x)
    inter = jnp.sum(p * y)
    union = jnp.sum(p) + jnp.sum(y)
    iou = inter / (union - inter + eps)
    bce = jnp.mean(jnp.maximum(x, 0.0) - x * y + jnp.log1p(jnp.exp(-jnp.abs(x))))
    return (1.0 - iou) + bce


if __name__ == "__main__":
    key = jax.random.PRNGKey(0)
    k1, k2 = jax.random.split(key)
    # NCHW, small shapes
    outputs = jax.random.normal(k1, (2, 4, 16, 16), dtype=jnp.float32)
    targets = (jax.random.uniform(k2, (2, 4, 16, 16)) > 0.5).astype(jnp.float32)

    loss = bce_iou_loss(outputs, targets)
    loss = jax.block_until_ready(loss)

    ref = _reference(outputs, targets)
    assert jnp.allclose(loss, ref, rtol=1e-5, atol=1e-5), (loss, ref)
    print("KERNEL_OK")
</pallas_src>

<mosaic_0001>
module attributes {stable_mosaic.version = 11 : i64} {
  func.func @_bce_iou_partial_kernel(%arg0: i32, %arg1: i32, %arg2: memref<16x128xf32, #tpu.memory_space<vmem>>, %arg3: memref<16x128xbf16, #tpu.memory_space<vmem>>, %arg4: memref<1x3xf32, #tpu.memory_space<smem>>, %arg5: memref<8x128xf32, #tpu.memory_space<vmem>>, %arg6: memref<8x128xf32, #tpu.memory_space<vmem>>, %arg7: memref<8x128xf32, #tpu.memory_space<vmem>>) attributes {dimension_semantics = [#tpu.dimension_semantics<arbitrary>, #tpu.dimension_semantics<arbitrary>], iteration_bounds = array<i64: 1, 1>, scalar_prefetch = 0 : i64, scratch_operands = 3 : i64, tpu.core_type = #tpu.core_type<tc>, window_params = [{transform_indices = @transform_0, window_bounds = array<i64: 16, 128>}, {transform_indices = @transform_1, window_bounds = array<i64: 16, 128>}, {transform_indices = @transform_2, window_bounds = array<i64: 1, 3>}]} {
    %c0_i32 = arith.constant 0 : i32
    %0 = arith.cmpi eq, %arg1, %c0_i32 : i32
    %1 = arith.extui %0 : i1 to i32
    %c0_i32_0 = arith.constant 0 : i32
    %2 = arith.cmpi ne, %1, %c0_i32_0 : i32
    scf.if %2 {
      %cst = arith.constant 0.000000e+00 : f32
      %19 = vector.broadcast %cst : f32 to vector<8x128xf32>
      %c0 = arith.constant 0 : index
      %c0_8 = arith.constant 0 : index
      %20 = vector.load %arg5[%c0, %c0_8] : memref<8x128xf32, #tpu.memory_space<vmem>>, vector<8x128xf32>
      tpu.vector_store %arg5[%c0, %c0_8], %19 {strides = array<i32>} : memref<8x128xf32, #tpu.memory_space<vmem>>, vector<8x128xf32>,
      %cst_9 = arith.constant 0.000000e+00 : f32
      %21 = vector.broadcast %cst_9 : f32 to vector<8x128xf32>
      %c0_10 = arith.constant 0 : index
      %c0_11 = arith.constant 0 : index
      %22 = vector.load %arg6[%c0_10, %c0_11] : memref<8x128xf32, #tpu.memory_space<vmem>>, vector<8x128xf32>
      tpu.vector_store %arg6[%c0_10, %c0_11], %21 {strides = array<i32>} : memref<8x128xf32, #tpu.memory_space<vmem>>, vector<8x128xf32>,
      %cst_12 = arith.constant 0.000000e+00 : f32
      %23 = vector.broadcast %cst_12 : f32 to vector<8x128xf32>
      %c0_13 = arith.constant 0 : index
      %c0_14 = arith.constant 0 : index
      %24 = vector.load %arg7[%c0_13, %c0_14] : memref<8x128xf32, #tpu.memory_space<vmem>>, vector<8x128xf32>
      tpu.vector_store %arg7[%c0_13, %c0_14], %23 {strides = array<i32>} : memref<8x128xf32, #tpu.memory_space<vmem>>, vector<8x128xf32>,
    } else {
    }
    %c1_i32 = arith.constant 1 : i32
    %3 = arith.muli %arg0, %c1_i32 : i32
    %4 = arith.addi %3, %arg1 : i32
    %c16_i32 = arith.constant 16 : i32
    %5 = arith.muli %4, %c16_i32 : i32
    %c1_i32_1 = arith.constant 1 : i32
    %6 = arith.cmpi slt, %4, %c1_i32_1 : i32
    %c16_i32_2 = arith.constant 16 : i32
    %7 = arith.addi %5, %c16_i32_2 : i32
    %c16_i32_3 = arith.constant 16 : i32
    %8 = arith.cmpi sle, %7, %c16_i32_3 : i32
    %9 = arith.andi %6, %8 : i1
    %10 = arith.extui %9 : i1 to i32
    %c0_i32_4 = arith.constant 0 : i32
    %11 = arith.cmpi ne, %10, %c0_i32_4 : i32
    scf.if %11 {
      %c0 = arith.constant 0 : index
      %c0_8 = arith.constant 0 : index
      %19 = vector.load %arg2[%c0, %c0_8] : memref<16x128xf32, #tpu.memory_space<vmem>>, vector<16x128xf32>
      %c0_9 = arith.constant 0 : index
      %c0_10 = arith.constant 0 : index
      %20 = vector.load %arg3[%c0_9, %c0_10] : memref<16x128xbf16, #tpu.memory_space<vmem>>, vector<16x128xbf16>
      %21 = arith.extf %20 : vector<16x128xbf16> to vector<16x128xf32>
      %22 = math.absf %19 : vector<16x128xf32>
      %cst = arith.constant 0.000000e+00 : f32
      %23 = vector.broadcast %cst : f32 to vector<16x128xf32>
      %24 = arith.subf %23, %22 : vector<16x128xf32>
      %25 = math.exp %24 : vector<16x128xf32>
      %cst_11 = arith.constant 1.000000e+00 : f32
      %26 = vector.broadcast %cst_11 : f32 to vector<16x128xf32>
      %27 = arith.addf %26, %25 : vector<16x128xf32>
      %28 = tpu.reciprocal %27 : vector<16x128xf32> -> vector<16x128xf32>
      %cst_12 = arith.constant 0.000000e+00 : f32
      %29 = vector.broadcast %cst_12 : f32 to vector<16x128xf32>
      %30 = arith.cmpf oge, %19, %29 : vector<16x128xf32>
      %31 = arith.mulf %25, %28 : vector<16x128xf32>
      %32 = arith.select %30, %28, %31 : vector<16x128xi1>, vector<16x128xf32>
      %cst_13 = arith.constant 0.000000e+00 : f32
      %33 = vector.broadcast %cst_13 : f32 to vector<16x128xf32>
      %34 = arith.maximumf %19, %33 : vector<16x128xf32>
      %35 = arith.mulf %19, %21 : vector<16x128xf32>
      %36 = arith.subf %34, %35 : vector<16x128xf32>
      %37 = math.log1p %25 : vector<16x128xf32>
      %38 = arith.addf %36, %37 : vector<16x128xf32>
      %c0_14 = arith.constant 0 : index
      %c0_15 = arith.constant 0 : index
      %39 = vector.load %arg5[%c0_14, %c0_15] : memref<8x128xf32, #tpu.memory_space<vmem>>, vector<8x128xf32>
      %40 = arith.mulf %32, %21 : vector<16x128xf32>
      %41 = vector.shape_cast %40 : vector<16x128xf32> to vector<2x8x128xf32>
      %cst_16 = arith.constant dense<0.000000e+00> : vector<8x128xf32>
      %42 = vector.multi_reduction <add>, %41, %cst_16 [0] : vector<2x8x128xf32> to vector<8x128xf32>
      %43 = arith.addf %39, %42 : vector<8x128xf32>
      %c0_17 = arith.constant 0 : index
      %c0_18 = arith.constant 0 : index
      %44 = vector.load %arg5[%c0_17, %c0_18] : memref<8x128xf32, #tpu.memory_space<vmem>>, vector<8x128xf32>
      tpu.vector_store %arg5[%c0_17, %c0_18], %43 {strides = array<i32>} : memref<8x128xf32, #tpu.memory_space<vmem>>, vector<8x128xf32>,
      %c0_19 = arith.constant 0 : index
      %c0_20 = arith.constant 0 : index
      %45 = vector.load %arg6[%c0_19, %c0_20] : memref<8x128xf32, #tpu.memory_space<vmem>>, vector<8x128xf32>
      %46 = arith.addf %32, %21 : vector<16x128xf32>
      %47 = vector.shape_cast %46 : vector<16x128xf32> to vector<2x8x128xf32>
      %cst_21 = arith.constant dense<0.000000e+00> : vector<8x128xf32>
      %48 = vector.multi_reduction <add>, %47, %cst_21 [0] : vector<2x8x128xf32> to vector<8x128xf32>
      %49 = arith.addf %45, %48 : vector<8x128xf32>
      %c0_22 = arith.constant 0 : index
      %c0_23 = arith.constant 0 : index
      %50 = vector.load %arg6[%c0_22, %c0_23] : memref<8x128xf32, #tpu.memory_space<vmem>>, vector<8x128xf32>
      tpu.vector_store %arg6[%c0_22, %c0_23], %49 {strides = array<i32>} : memref<8x128xf32, #tpu.memory_space<vmem>>, vector<8x128xf32>,
      %c0_24 = arith.constant 0 : index
      %c0_25 = arith.constant 0 : index
      %51 = vector.load %arg7[%c0_24, %c0_25] : memref<8x128xf32, #tpu.memory_space<vmem>>, vector<8x128xf32>
      %52 = vector.shape_cast %38 : vector<16x128xf32> to vector<2x8x128xf32>
      %cst_26 = arith.constant dense<0.000000e+00> : vector<8x128xf32>
      %53 = vector.multi_reduction <add>, %52, %cst_26 [0] : vector<2x8x128xf32> to vector<8x128xf32>
      %54 = arith.addf %51, %53 : vector<8x128xf32>
      %c0_27 = arith.constant 0 : index
      %c0_28 = arith.constant 0 : index
      %55 = vector.load %arg7[%c0_27, %c0_28] : memref<8x128xf32, #tpu.memory_space<vmem>>, vector<8x128xf32>
      tpu.vector_store %arg7[%c0_27, %c0_28], %54 {strides = array<i32>} : memref<8x128xf32, #tpu.memory_space<vmem>>, vector<8x128xf32>,
    } else {
    }
    %true = arith.constant true
    %12 = arith.xori %8, %true : i1
    %13 = arith.andi %6, %12 : i1
    %14 = arith.extui %13 : i1 to i32
    %c0_i32_5 = arith.constant 0 : i32
    %15 = arith.cmpi ne, %14, %c0_i32_5 : i32
    scf.if %15 {
      %c0 = arith.constant 0 : index
      %c0_8 = arith.constant 0 : index
      %19 = vector.load %arg2[%c0, %c0_8] : memref<16x128xf32, #tpu.memory_space<vmem>>, vector<16x128xf32>
      %c0_9 = arith.constant 0 : index
      %c0_10 = arith.constant 0 : index
      %20 = vector.load %arg3[%c0_9, %c0_10] : memref<16x128xbf16, #tpu.memory_space<vmem>>, vector<16x128xbf16>
      %21 = arith.extf %20 : vector<16x128xbf16> to vector<16x128xf32>
      %22 = tpu.iota {dimensions = array<i32: 0>} : vector<16x128xi32>
      %23 = vector.broadcast %5 : i32 to vector<16x128xi32>
      %24 = arith.addi %23, %22 : vector<16x128xi32>
      %c16_i32_11 = arith.constant 16 : i32
      %25 = vector.broadcast %c16_i32_11 : i32 to vector<16x128xi32>
      %26 = arith.cmpi slt, %24, %25 : vector<16x128xi32>
      %cst = arith.constant 0.000000e+00 : f32
      %27 = vector.broadcast %cst : f32 to vector<16x128xf32>
      %28 = arith.select %26, %19, %27 : vector<16x128xi1>, vector<16x128xf32>
      %cst_12 = arith.constant 0.000000e+00 : f32
      %29 = vector.broadcast %cst_12 : f32 to vector<16x128xf32>
      %30 = arith.select %26, %21, %29 : vector<16x128xi1>, vector<16x128xf32>
      %31 = math.absf %28 : vector<16x128xf32>
      %cst_13 = arith.constant 0.000000e+00 : f32
      %32 = vector.broadcast %cst_13 : f32 to vector<16x128xf32>
      %33 = arith.subf %32, %31 : vector<16x128xf32>
      %34 = math.exp %33 : vector<16x128xf32>
      %cst_14 = arith.constant 1.000000e+00 : f32
      %35 = vector.broadcast %cst_14 : f32 to vector<16x128xf32>
      %36 = arith.addf %35, %34 : vector<16x128xf32>
      %37 = tpu.reciprocal %36 : vector<16x128xf32> -> vector<16x128xf32>
      %cst_15 = arith.constant 0.000000e+00 : f32
      %38 = vector.broadcast %cst_15 : f32 to vector<16x128xf32>
      %39 = arith.cmpf oge, %28, %38 : vector<16x128xf32>
      %40 = arith.mulf %34, %37 : vector<16x128xf32>
      %41 = arith.select %39, %37, %40 : vector<16x128xi1>, vector<16x128xf32>
      %cst_16 = arith.constant 0.000000e+00 : f32
      %42 = vector.broadcast %cst_16 : f32 to vector<16x128xf32>
      %43 = arith.maximumf %28, %42 : vector<16x128xf32>
      %44 = arith.mulf %28, %30 : vector<16x128xf32>
      %45 = arith.subf %43, %44 : vector<16x128xf32>
      %46 = math.log1p %34 : vector<16x128xf32>
      %47 = arith.addf %45, %46 : vector<16x128xf32>
      %cst_17 = arith.constant 0.000000e+00 : f32
      %48 = vector.broadcast %cst_17 : f32 to vector<16x128xf32>
      %49 = arith.select %26, %41, %48 : vector<16x128xi1>, vector<16x128xf32>
      %cst_18 = arith.constant 0.000000e+00 : f32
      %50 = vector.broadcast %cst_18 : f32 to vector<16x128xf32>
      %51 = arith.select %26, %47, %50 : vector<16x128xi1>, vector<16x128xf32>
      %c0_19 = arith.constant 0 : index
      %c0_20 = arith.constant 0 : index
      %52 = vector.load %arg5[%c0_19, %c0_20] : memref<8x128xf32, #tpu.memory_space<vmem>>, vector<8x128xf32>
      %53 = arith.mulf %49, %30 : vector<16x128xf32>
      %54 = vector.shape_cast %53 : vector<16x128xf32> to vector<2x8x128xf32>
      %cst_21 = arith.constant dense<0.000000e+00> : vector<8x128xf32>
      %55 = vector.multi_reduction <add>, %54, %cst_21 [0] : vector<2x8x128xf32> to vector<8x128xf32>
      %56 = arith.addf %52, %55 : vector<8x128xf32>
      %c0_22 = arith.constant 0 : index
      %c0_23 = arith.constant 0 : index
      %57 = vector.load %arg5[%c0_22, %c0_23] : memref<8x128xf32, #tpu.memory_space<vmem>>, vector<8x128xf32>
      tpu.vector_store %arg5[%c0_22, %c0_23], %56 {strides = array<i32>} : memref<8x128xf32, #tpu.memory_space<vmem>>, vector<8x128xf32>,
      %c0_24 = arith.constant 0 : index
      %c0_25 = arith.constant 0 : index
      %58 = vector.load %arg6[%c0_24, %c0_25] : memref<8x128xf32, #tpu.memory_space<vmem>>, vector<8x128xf32>
      %59 = arith.addf %49, %30 : vector<16x128xf32>
      %60 = vector.shape_cast %59 : vector<16x128xf32> to vector<2x8x128xf32>
      %cst_26 = arith.constant dense<0.000000e+00> : vector<8x128xf32>
      %61 = vector.multi_reduction <add>, %60, %cst_26 [0] : vector<2x8x128xf32> to vector<8x128xf32>
      %62 = arith.addf %58, %61 : vector<8x128xf32>
      %c0_27 = arith.constant 0 : index
      %c0_28 = arith.constant 0 : index
      %63 = vector.load %arg6[%c0_27, %c0_28] : memref<8x128xf32, #tpu.memory_space<vmem>>, vector<8x128xf32>
      tpu.vector_store %arg6[%c0_27, %c0_28], %62 {strides = array<i32>} : memref<8x128xf32, #tpu.memory_space<vmem>>, vector<8x128xf32>,
      %c0_29 = arith.constant 0 : index
      %c0_30 = arith.constant 0 : index
      %64 = vector.load %arg7[%c0_29, %c0_30] : memref<8x128xf32, #tpu.memory_space<vmem>>, vector<8x128xf32>
      %65 = vector.shape_cast %51 : vector<16x128xf32> to vector<2x8x128xf32>
      %cst_31 = arith.constant dense<0.000000e+00> : vector<8x128xf32>
      %66 = vector.multi_reduction <add>, %65, %cst_31 [0] : vector<2x8x128xf32> to vector<8x128xf32>
      %67 = arith.addf %64, %66 : vector<8x128xf32>
      %c0_32 = arith.constant 0 : index
      %c0_33 = arith.constant 0 : index
      %68 = vector.load %arg7[%c0_32, %c0_33] : memref<8x128xf32, #tpu.memory_space<vmem>>, vector<8x128xf32>
      tpu.vector_store %arg7[%c0_32, %c0_33], %67 {strides = array<i32>} : memref<8x128xf32, #tpu.memory_space<vmem>>, vector<8x128xf32>,
    } else {
    }
    %c0_i32_6 = arith.constant 0 : i32
    %16 = arith.cmpi eq, %arg1, %c0_i32_6 : i32
    %17 = arith.extui %16 : i1 to i32
    %c0_i32_7 = arith.constant 0 : i32
    %18 = arith.cmpi ne, %17, %c0_i32_7 : i32
    scf.if %18 {
      %c0 = arith.constant 0 : index
      %c0_8 = arith.constant 0 : index
      %19 = vector.load %arg5[%c0, %c0_8] : memref<8x128xf32, #tpu.memory_space<vmem>>, vector<8x128xf32>
      %20 = vector.shape_cast %19 : vector<8x128xf32> to vector<1x8x128xf32>
      %cst = arith.constant dense<0.000000e+00> : vector<1xf32>
      %21 = vector.multi_reduction <add>, %20, %cst [1, 2] : vector<1x8x128xf32> to vector<1xf32>
      %22 = vector.shape_cast %21 : vector<1xf32> to vector<1x1x1xf32>
      %23 = vector.extract %22[0, 0, 0] : f32 from vector<1x1x1xf32>
      %c0_9 = arith.constant 0 : index
      %c0_10 = arith.constant 0 : index
      %24 = memref.load %arg4[%c0_9, %c0_10] : memref<1x3xf32, #tpu.memory_space<smem>>
      memref.store %23, %arg4[%c0_9, %c0_10] : memref<1x3xf32, #tpu.memory_space<smem>>
      %c0_11 = arith.constant 0 : index
      %c0_12 = arith.constant 0 : index
      %25 = vector.load %arg6[%c0_11, %c0_12] : memref<8x128xf32, #tpu.memory_space<vmem>>, vector<8x128xf32>
      %26 = vector.shape_cast %25 : vector<8x128xf32> to vector<1x8x128xf32>
      %cst_13 = arith.constant dense<0.000000e+00> : vector<1xf32>
      %27 = vector.multi_reduction <add>, %26, %cst_13 [1, 2] : vector<1x8x128xf32> to vector<1xf32>
      %28 = vector.shape_cast %27 : vector<1xf32> to vector<1x1x1xf32>
      %29 = vector.extract %28[0, 0, 0] : f32 from vector<1x1x1xf32>
      %c0_14 = arith.constant 0 : index
      %c1 = arith.constant 1 : index
      %30 = memref.load %arg4[%c0_14, %c1] : memref<1x3xf32, #tpu.memory_space<smem>>
      memref.store %29, %arg4[%c0_14, %c1] : memref<1x3xf32, #tpu.memory_space<smem>>
      %c0_15 = arith.constant 0 : index
      %c0_16 = arith.constant 0 : index
      %31 = vector.load %arg7[%c0_15, %c0_16] : memref<8x128xf32, #tpu.memory_space<vmem>>, vector<8x128xf32>
      %32 = vector.shape_cast %31 : vector<8x128xf32> to vector<1x8x128xf32>
      %cst_17 = arith.constant dense<0.000000e+00> : vector<1xf32>
      %33 = vector.multi_reduction <add>, %32, %cst_17 [1, 2] : vector<1x8x128xf32> to vector<1xf32>
      %34 = vector.shape_cast %33 : vector<1xf32> to vector<1x1x1xf32>
      %35 = vector.extract %34[0, 0, 0] : f32 from vector<1x1x1xf32>
      %c0_18 = arith.constant 0 : index
      %c2 = arith.constant 2 : index
      %36 = memref.load %arg4[%c0_18, %c2] : memref<1x3xf32, #tpu.memory_space<smem>>
      memref.store %35, %arg4[%c0_18, %c2] : memref<1x3xf32, #tpu.memory_space<smem>>
    } else {
    }
    return
  }
  func.func @transform_0(%arg0: i32, %arg1: i32) -> (i32, i32) {
    %c1_i32 = arith.constant 1 : i32
    %0 = arith.muli %arg0, %c1_i32 : i32
    %1 = arith.addi %0, %arg1 : i32
    %c0_i32 = arith.constant 0 : i32
    %2 = arith.minsi %1, %c0_i32 : i32
    %c0_i32_0 = arith.constant 0 : i32
    %c0_i32_1 = arith.constant 0 : i32
    return %2, %c0_i32_0 : i32, i32
  }
  func.func @transform_1(%arg0: i32, %arg1: i32) -> (i32, i32) {
    %c1_i32 = arith.constant 1 : i32
    %0 = arith.muli %arg0, %c1_i32 : i32
    %1 = arith.addi %0, %arg1 : i32
    %c0_i32 = arith.constant 0 : i32
    %2 = arith.minsi %1, %c0_i32 : i32
    %c0_i32_0 = arith.constant 0 : i32
    %c0_i32_1 = arith.constant 0 : i32
    return %2, %c0_i32_0 : i32, i32
  }
  func.func @transform_2(%arg0: i32, %arg1: i32) -> (i32, i32) {
    %c0_i32 = arith.constant 0 : i32
    %c0_i32_0 = arith.constant 0 : i32
    return %arg0, %c0_i32 : i32, i32
  }
}

</mosaic_0001>

<llo_original>
// kernel: tpu_custom_call.1
$region0: #{tpu_custom_call.1}
  #allocation0 [shape = 'u32[]', space=smem, size = 0x4, offset = 0x4, fixed_abs, tag = 'smem constant byte address 0x4 - core index']
  #allocation1 [shape = 'u32[144,128]{1,0:T(1,128)}', space=vmem, size = 0x12000, scoped, tag = 'internal scratch']
  #allocation2 [shape = 'f32[8,128]{1,0:T(8,128)}', space=vmem, size = 0x1000, scoped, tag = 'scratch operand']
  #allocation3 [shape = 'f32[8,128]{1,0:T(8,128)}', space=vmem, size = 0x1000, scoped, tag = 'scratch operand']
  #allocation4 [shape = 'f32[8,128]{1,0:T(8,128)}', space=vmem, size = 0x1000, scoped, tag = 'scratch operand']
  %s0 = inlined_call_operand.hbm [shape: f32[16,128], index: 0, kind: input, shape index: {}]
  %s1 = inlined_call_operand.hbm [shape: bf16[16,128], index: 1, kind: input, shape index: {}]
  %s2 = inlined_call_operand.hbm [shape: f32[1,3], index: 2, kind: output, shape index: {}]
  %s3 = sld [smem:[#allocation0]]
  $region42: #{tpu_custom_call.1} parent=0
    _
  %s5 = ssub.s32 1, %s3
  %s6 = scalar_select 0, %s5, %s3
  $region1: #{tpu_custom_call.1} parent=0
    #allocation5 [shape = 'u8[8192]{0}', space=vmem, size = 0x2000, scoped, tag = 'input window, operand 0, single buffered']
    #allocation6 [shape = 's32[1]{0}', space=sflag, size = 0x4, scoped, tag = 'scoped memory for tpu_custom_call.1']
    #allocation7 [shape = 's32[1]{0}', space=sflag, size = 0x4, scoped, tag = 'scoped memory for tpu_custom_call.1']
    #allocation8 [shape = 'u8[4096]{0}', space=vmem, size = 0x1000, scoped, tag = 'input window, operand 1, single buffered']
    #allocation9 [shape = 's32[1]{0}', space=sflag, size = 0x4, scoped, tag = 'scoped memory for tpu_custom_call.1']
    #allocation10 [shape = 'u8[512]{0}', space=smem, size = 0x200, scoped, tag = 'output window, operand 0, single buffered']
    %7 = vsyncpa [#allocation6], 0
    %8 = vsyncpa [#allocation9], 0
    %9 = vsyncpa [#allocation7], 0
    // Predicated region
    $region2: #{tpu_custom_call.1} parent=1 // pred_check
      _
    $region3: #{tpu_custom_call.1} parent=1 // pred_check_branch
      %11 = sbr.rel (0) target = $region5
    $region4: #{tpu_custom_call.1} parent=1 // pred_region
      %s12 = sadd.s32 0, 0
      %p13 = scmp.lt.s32.totalorder %s12, 0
      %s14 = scalar_select %p13, %s12, 0
      %s15 = smul.u32 2, %s14
      %s17 = ssub.s32 256, 256
      %18 = vsyncadd [#allocation6], %s17
      %s19 = smul.addr %s15, 128
      %s20 = scalar_lea.hbm %s0, %s19
      %s21 = sshll.u32 [#allocation5], 4
      %s22 = int_to_ptr.vmem [resolvable:$true] %s21
      %27 = dma.hbm_to_vmem [thread:$0]  %s20, 256, %s22, [#allocation6], 128, 128, 8
    $region5: #{tpu_custom_call.1} parent=1 // pred_fallthru
      _
    // Predicated region
    $region6: #{tpu_custom_call.1} parent=1 // pred_check
      _
    $region7: #{tpu_custom_call.1} parent=1 // pred_check_branch
      %29 = sbr.rel (0) target = $region9
    $region8: #{tpu_custom_call.1} parent=1 // pred_region
      %s30 = sadd.s32 0, 0
      %p31 = scmp.lt.s32.totalorder %s30, 0
      %s32 = scalar_select %p31, %s30, 0
      %s33 = smul.u32 2, %s32
      %s35 = ssub.s32 128, 128
      %36 = vsyncadd [#allocation9], %s35
      %s37 = smul.addr %s33, 64
      %s38 = scalar_lea.hbm %s1, %s37
      %s39 = sshll.u32 [#allocation8], 4
      %s40 = int_to_ptr.vmem [resolvable:$true] %s39
      %45 = dma.hbm_to_vmem [thread:$0]  %s38, 128, %s40, [#allocation9], 64, 64, 4
    $region9: #{tpu_custom_call.1} parent=1 // pred_fallthru
      _
    // Predicated region
    $region10: #{tpu_custom_call.1} parent=1 // pred_check
      _
    $region11: #{tpu_custom_call.1} parent=1 // pred_check_branch
      %47 = sbr.rel (0) target = $region13
    $region12: #{tpu_custom_call.1} parent=1 // pred_region
      %48 = dma.done [#allocation6], 256
    $region13: #{tpu_custom_call.1} parent=1 // pred_fallthru
      _
    // Predicated region
    $region14: #{tpu_custom_call.1} parent=1 // pred_check
      _
    $region15: #{tpu_custom_call.1} parent=1 // pred_check_branch
      %50 = sbr.rel (0) target = $region17
    $region16: #{tpu_custom_call.1} parent=1 // pred_region
      %51 = dma.done [#allocation9], 128
    $region17: #{tpu_custom_call.1} parent=1 // pred_fallthru
      _
    %s52 = sadd.s32 0, 0
    %p53 = scmp.lt.s32.totalorder %s52, 0
    %s54 = scalar_select %p53, %s52, 0
    %s55 = smul.u32 2, %s54
    %s56 = sadd.s32 0, 0
    %p57 = scmp.lt.s32.totalorder %s56, 0
    %s58 = scalar_select %p57, %s56, 0
    %s59 = smul.u32 2, %s58
    %p60 = scmp.eq.s32.totalorder 0, 0
    // Predicated region
    $region18: #{tpu_custom_call.1} parent=1 // pred_check
      %p61 = pneg %p60
    $region19: #{tpu_custom_call.1} parent=1 // pred_check_branch
      %63 = sbr.rel (%p61) target = $region21
    $region20: #{tpu_custom_call.1} parent=1 // pred_region
      %64 = vst [vmem:[#allocation2] sm:$0xff] 0.0
      %65 = vst [vmem:[#allocation3] sm:$0xff] 0.0
      %66 = vst [vmem:[#allocation4] sm:$0xff] 0.0
    $region21: #{tpu_custom_call.1} parent=1 // pred_fallthru
      _
    %s67 = sadd.s32 0, 0
    %s68 = smul.u32 %s67, 16
    %p69 = scmp.lt.s32.totalorder %s67, 1
    %s70 = sadd.s32 %s68, 16
    %p71 = scmp.le.s32.totalorder %s70, 16
    %p72 = pnand %p69, %p71
    %p73 = pneg %p72
    // Predicated region
    $region22: #{tpu_custom_call.1} parent=1 // pred_check
      _
    $region23: #{tpu_custom_call.1} parent=1 // pred_check_branch
      %75 = sbr.rel (%p72) target = $region25
    $region24: #{tpu_custom_call.1} parent=1 // pred_region
      %v76 = vld [vmem:[#allocation5] sm:$0xff]
      %v77 = vld [vmem:[#allocation5 + $0x8] sm:$0xff]
      %v78 = vld [vmem:[#allocation8] sm:$0xf]
      %v79 = vld [vmem:[#allocation8 + $0x4] sm:$0xf]
      %v80 = vunpack.c.l.bf16 %v78
      %v81 = vunpack.c.l.bf16 %v79
      %v82 = vand.u32 2147483647, %v76
      %v83 = vand.u32 2147483647, %v77
      %v84 = vsub.f32 0.0, %v82
      %v85 = vsub.f32 0.0, %v83
      %v86 = vmul.f32 %v84, 1.442695
      %v87 = vpow.pop %v86
      %v88 = vmul.f32 %v85, 1.442695
      %v89 = vpow.pop %v88
      %v90 = vadd.f32 %v87, 1.0
      %v91 = vadd.f32 %v89, 1.0
      %v92 = vrcp.pop %v90
      %v93 = vrcp.pop %v91
      %vm94 = vcmp.ge.f32.partialorder %v76, 0.0
      %vm95 = vcmp.ge.f32.partialorder %v77, 0.0
      %v96 = vmul.f32 %v87, %v92
      %v97 = vmul.f32 %v89, %v93
      %v98 = vsel %vm94, %v92, %v96
      %v99 = vsel %vm95, %v93, %v97
      %v100 = vmax.f32 %v76, 0.0
      %v101 = vmax.f32 %v77, 0.0
      %v102 = vmul.f32 %v76, %v80
      %v103 = vmul.f32 %v77, %v81
      %v104 = vsub.f32 %v100, %v102
      %v105 = vsub.f32 %v101, %v103
      %v106 = vadd.f32 %v87, 1.0
      %v107 = vlog2.pop %v106
      %v108 = vmul.f32 %v107, 0.6931472
      %v109 = vmul.f32 -0.5, %v87
      %v110 = vadd.f32 %v109, 1.0
      %v111 = vmul.f32 %v110, %v87
      %v112 = vand.u32 2147483647, %v87
      %vm113 = vcmp.lt.f32.partialorder %v112, 0.0004427343
      %v114 = vsel %vm113, %v111, %v108
      %v115 = vadd.f32 %v89, 1.0
      %v116 = vlog2.pop %v115
      %v117 = vmul.f32 %v116, 0.6931472
      %v118 = vmul.f32 -0.5, %v89
      %v119 = vadd.f32 %v118, 1.0
      %v120 = vmul.f32 %v119, %v89
      %v121 = vand.u32 2147483647, %v89
      %vm122 = vcmp.lt.f32.partialorder %v121, 0.0004427343
      %v123 = vsel %vm122, %v120, %v117
      %v124 = vadd.f32 %v104, %v114
      %v125 = vadd.f32 %v105, %v123
      %v126 = vld [vmem:[#allocation2] sm:$0xff]
      %v127 = vmul.f32 %v98, %v80
      %v128 = vmul.f32 %v99, %v81
      %v129 = vadd.f32 %v127, %v128
      %v130 = vadd.f32 %v126, %v129
      %131 = vst [vmem:[#allocation2] sm:$0xff] %v130
      %v132 = vld [vmem:[#allocation3] sm:$0xff]
      %v133 = vadd.f32 %v98, %v80
      %v134 = vadd.f32 %v99, %v81
      %v135 = vadd.f32 %v133, %v134
      %v136 = vadd.f32 %v132, %v135
      %137 = vst [vmem:[#allocation3] sm:$0xff] %v136
      %v138 = vld [vmem:[#allocation4] sm:$0xff]
      %v139 = vadd.f32 %v124, %v125
      %v140 = vadd.f32 %v138, %v139
      %141 = vst [vmem:[#allocation4] sm:$0xff] %v140
    $region25: #{tpu_custom_call.1} parent=1 // pred_fallthru
      _
    %p142 = scmp.gt.s32.totalorder %s70, 16
    %p143 = pnand %p69, %p142
    %p144 = pneg %p143
    // Predicated region
    $region26: #{tpu_custom_call.1} parent=1 // pred_check
      _
    $region27: #{tpu_custom_call.1} parent=1 // pred_check_branch
      %146 = sbr.rel (%p143) target = $region29
    $region28: #{tpu_custom_call.1} parent=1 // pred_region
      %v147 = vld [vmem:[#allocation5] sm:$0xff]
      %v148 = vld [vmem:[#allocation5 + $0x8] sm:$0xff]
      %v149 = vld [vmem:[#allocation8] sm:$0xf]
      %v150 = vld [vmem:[#allocation8 + $0x4] sm:$0xf]
      %v151 = vunpack.c.l.bf16 %v149
      %v152 = vunpack.c.l.bf16 %v150
      %v153 = vlaneseq
      %v154 = vshrl.u32 %v153, 7
      %v155 = vadd.s32 %v154, 8
      %v156 = vstv %s68
      %v157 = vadd.s32 %v156, %v154
      %v158 = vadd.s32 %v156, %v155
      %vm159 = vcmp.lt.s32.totalorder %v157, 16
      %vm160 = vcmp.lt.s32.totalorder %v158, 16
      %v161 = vsel %vm159, %v147, 0.0
      %v162 = vsel %vm160, %v148, 0.0
      %v163 = vsel %vm159, %v151, 0.0
      %v164 = vsel %vm160, %v152, 0.0
      %v165 = vand.u32 2147483647, %v161
      %v166 = vand.u32 2147483647, %v162
      %v167 = vsub.f32 0.0, %v165
      %v168 = vsub.f32 0.0, %v166
      %v169 = vmul.f32 %v167, 1.442695
      %v170 = vpow.pop %v169
      %v171 = vmul.f32 %v168, 1.442695
      %v172 = vpow.pop %v171
      %v173 = vadd.f32 %v170, 1.0
      %v174 = vadd.f32 %v172, 1.0
      %v175 = vrcp.pop %v173
      %v176 = vrcp.pop %v174
      %vm177 = vcmp.ge.f32.partialorder %v161, 0.0
      %vm178 = vcmp.ge.f32.partialorder %v162, 0.0
      %v179 = vmul.f32 %v170, %v175
      %v180 = vmul.f32 %v172, %v176
      %v181 = vsel %vm177, %v175, %v179
      %v182 = vsel %vm178, %v176, %v180
      %v183 = vmax.f32 %v161, 0.0
      %v184 = vmax.f32 %v162, 0.0
      %v185 = vmul.f32 %v161, %v163
      %v186 = vmul.f32 %v162, %v164
      %v187 = vsub.f32 %v183, %v185
      %v188 = vsub.f32 %v184, %v186
      %v189 = vadd.f32 %v170, 1.0
      %v190 = vlog2.pop %v189
      %v191 = vmul.f32 %v190, 0.6931472
      %v192 = vmul.f32 -0.5, %v170
      %v193 = vadd.f32 %v192, 1.0
      %v194 = vmul.f32 %v193, %v170
      %v195 = vand.u32 2147483647, %v170
      %vm196 = vcmp.lt.f32.partialorder %v195, 0.0004427343
      %v197 = vsel %vm196, %v194, %v191
      %v198 = vadd.f32 %v172, 1.0
      %v199 = vlog2.pop %v198
      %v200 = vmul.f32 %v199, 0.6931472
      %v201 = vmul.f32 -0.5, %v172
      %v202 = vadd.f32 %v201, 1.0
      %v203 = vmul.f32 %v202, %v172
      %v204 = vand.u32 2147483647, %v172
      %vm205 = vcmp.lt.f32.partialorder %v204, 0.0004427343
      %v206 = vsel %vm205, %v203, %v200
      %v207 = vadd.f32 %v187, %v197
      %v208 = vadd.f32 %v188, %v206
      %v209 = vsel %vm159, %v181, 0.0
      %v210 = vsel %vm160, %v182, 0.0
      %v211 = vsel %vm159, %v207, 0.0
      %v212 = vsel %vm160, %v208, 0.0
      %v213 = vld [vmem:[#allocation2] sm:$0xff]
      %v214 = vmul.f32 %v209, %v163
      %v215 = vmul.f32 %v210, %v164
      %v216 = vadd.f32 %v214, %v215
      %v217 = vadd.f32 %v213, %v216
      %218 = vst [vmem:[#allocation2] sm:$0xff] %v217
      %v219 = vld [vmem:[#allocation3] sm:$0xff]
      %v220 = vadd.f32 %v209, %v163
      %v221 = vadd.f32 %v210, %v164
      %v222 = vadd.f32 %v220, %v221
      %v223 = vadd.f32 %v219, %v222
      %224 = vst [vmem:[#allocation3] sm:$0xff] %v223
      %v225 = vld [vmem:[#allocation4] sm:$0xff]
      %v226 = vadd.f32 %v211, %v212
      %v227 = vadd.f32 %v225, %v226
      %228 = vst [vmem:[#allocation4] sm:$0xff] %v227
    $region29: #{tpu_custom_call.1} parent=1 // pred_fallthru
      _
    // Predicated region
    $region30: #{tpu_custom_call.1} parent=1 // pred_check
      %p229 = pneg %p60
    $region31: #{tpu_custom_call.1} parent=1 // pred_check_branch
      %231 = sbr.rel (%p229) target = $region33
    $region32: #{tpu_custom_call.1} parent=1 // pred_region
      %v232 = vld [vmem:[#allocation2] sm:$0xff]
      %233 = vadd.xlane.f32.xlu0 %v232
      %v234 = vpop.xlane.xlu0 %233
      %v235 = vrot.slane %v234, 4
      %v236 = vadd.f32 %v234, %v235
      %v237 = vrot.slane %v236, 2
      %v238 = vadd.f32 %v236, %v237
      %v239 = vrot.slane %v238, 1
      %v240 = vadd.f32 %v238, %v239
      %s241 = vtos %v240
      %s242 = scalar_lea.smem [#allocation10], 0
      %243 = sst [smem:[%s242]] %s241
      %v244 = vld [vmem:[#allocation3] sm:$0xff]
      %245 = vadd.xlane.f32.xlu0 %v244
      %v246 = vpop.xlane.xlu0 %245
      %v247 = vrot.slane %v246, 4
      %v248 = vadd.f32 %v246, %v247
      %v249 = vrot.slane %v248, 2
      %v250 = vadd.f32 %v248, %v249
      %v251 = vrot.slane %v250, 1
      %v252 = vadd.f32 %v250, %v251
      %s253 = vtos %v252
      %s254 = scalar_lea.smem [#allocation10], 1
      %255 = sst [smem:[%s254]] %s253
      %v256 = vld [vmem:[#allocation4] sm:$0xff]
      %257 = vadd.xlane.f32.xlu0 %v256
      %v258 = vpop.xlane.xlu0 %257
      %v259 = vrot.slane %v258, 4
      %v260 = vadd.f32 %v258, %v259
      %v261 = vrot.slane %v260, 2
      %v262 = vadd.f32 %v260, %v261
      %v263 = vrot.slane %v262, 1
      %v264 = vadd.f32 %v262, %v263
      %s265 = vtos %v264
      %s266 = scalar_lea.smem [#allocation10], 2
      %267 = sst [smem:[%s266]] %s265
    $region33: #{tpu_custom_call.1} parent=1 // pred_fallthru
      _
    // Predicated region
    $region34: #{tpu_custom_call.1} parent=1 // pred_check
      _
    $region35: #{tpu_custom_call.1} parent=1 // pred_check_branch
      %269 = sbr.rel (0) target = $region37
    $region36: #{tpu_custom_call.1} parent=1 // pred_region
      %s271 = ssub.s32 16, 16
      %272 = vsyncadd [#allocation7], %s271
      %275 = dma.smem_to_hbm [#allocation10], 16, %s2, [#allocation7]
    $region37: #{tpu_custom_call.1} parent=1 // pred_fallthru
      _
    // Predicated region
    $region38: #{tpu_custom_call.1} parent=1 // pred_check
      _
    $region39: #{tpu_custom_call.1} parent=1 // pred_check_branch
      %277 = sbr.rel (0) target = $region41
    $region40: #{tpu_custom_call.1} parent=1 // pred_region
      %278 = dma.done [#allocation7], 16
    $region41: #{tpu_custom_call.1} parent=1 // pred_fallthru
      _
    %279 = sfence
    %280 = vsyncpa [#allocation6], 1
    %281 = vsyncpa [#allocation9], 1
    %282 = vsyncpa [#allocation7], 1

</llo_original>
